<compile_context>
chip_gen: v7x
topology: tpu7x:2x2x1
jax: 0.10.0
libtpu: 0.0.40
codegen_flags: <defaults>
</compile_context>

<pallas_src>
import functools

import jax
import jax.numpy as jnp
import numpy as np
from jax.experimental import pallas as pl
from jax.experimental.pallas import tpu as pltpu


def _round_up(x, m):
    return ((x + m - 1) // m) * m


def _tsne_block_kernel(bi_ref, bj_ref, rows_ref, cols_ref, rsq_ref, csq_ref,
                       q_ref, *, n_valid):
    """Computes one (T, T) upper-triangular block of the similarity matrix.

    bi_ref, bj_ref : SMEM prefetch tables mapping grid step -> block row/col.
    rows_ref       : (T, F) row tile of X
    cols_ref       : (T, F) column tile of X
    rsq_ref        : (T, 1) squared norms of the row tile
    csq_ref        : (1, T) squared norms of the column tile
    q_ref          : (T, T) output block, q_ij = 1/(1+||xi-xj||) if i<j<n else 0
    """
    t = pl.program_id(0)
    T = rows_ref.shape[0]
    bi = bi_ref[t]
    bj = bj_ref[t]

    rows = rows_ref[...]                                   # (T, F)
    cols = cols_ref[...]                                   # (T, F)

    # ||xi-xj||^2 = ||xi||^2 + ||xj||^2 - 2 xi.xj ; contract last dims on the
    # MXU (no transpose), fold the -2 into the small (T, F) operand.
    gram_m2 = jax.lax.dot_general(
        rows * (-2.0), cols,
        dimension_numbers=(((1,), (1,)), ((), ())),
        preferred_element_type=jnp.float32)                # (T, T)
    d2 = jnp.maximum(rsq_ref[...] + csq_ref[...] + gram_m2, 0.0)
    dist = jnp.sqrt(d2)
    q = 1.0 / (1.0 + dist)

    # Strictly upper-triangular mask on GLOBAL indices (matches torch.pdist)
    # plus masking of padded rows/columns.
    row_idx = jax.lax.broadcasted_iota(jnp.int32, (T, T), 0) + bi * T
    col_idx = jax.lax.broadcasted_iota(jnp.int32, (T, T), 1) + bj * T
    mask = (row_idx < col_idx) & (col_idx < n_valid)
    q_ref[...] = jnp.where(mask, q, 0.0)


def tsne_nn_forward(x, X, *, tile=128):
    """Pallas implementation of TSNE_NN.forward.

    x : ignored (matches the PyTorch module, which never uses its input).
    X : (n_samples, n_features) float32 parameter.
    tile : square block edge; multiple of 128 (128 is a good v5e default,
           256 for v6e/v7x).
    Returns (x_probs, X) where x_probs has shape (n_samples*(n_samples-1)//2,).
    """
    del x  # the PyTorch forward never touches its input
    N, F = X.shape
    T = min(tile, _round_up(N, 128))       # clamp tile for tiny problems
    n_pad = _round_up(N, T)
    nb = n_pad // T

    Xf = X.astype(jnp.float32)
    X_pad = jnp.pad(Xf, ((0, n_pad - N), (0, 0)))
    sq = jnp.sum(X_pad * X_pad, axis=-1)   # hoisted squared norms, computed once
    rsq = sq[:, None]                      # (n_pad, 1)
    csq = sq[None, :]                      # (1, n_pad)

    # Upper-triangular block schedule (bj >= bi), row-major. Static tables,
    # consumed via scalar prefetch by every index_map.
    pairs = [(bi, bj) for bi in range(nb) for bj in range(bi, nb)]
    bi_tbl = jnp.asarray([p[0] for p in pairs], dtype=jnp.int32)
    bj_tbl = jnp.asarray([p[1] for p in pairs], dtype=jnp.int32)
    num_pairs = len(pairs)

    kernel = functools.partial(_tsne_block_kernel, n_valid=N)

    q_mat = pl.pallas_call(
        kernel,
        out_shape=jax.ShapeDtypeStruct((n_pad, n_pad), jnp.float32),
        grid_spec=pltpu.PrefetchScalarGridSpec(
            num_scalar_prefetch=2,
            grid=(num_pairs,),
            in_specs=[
                pl.BlockSpec((T, F), lambda t, bi, bj: (bi[t], 0)),   # row tile
                pl.BlockSpec((T, F), lambda t, bi, bj: (bj[t], 0)),   # col tile
                pl.BlockSpec((T, 1), lambda t, bi, bj: (bi[t], 0)),   # row ||.||^2
                pl.BlockSpec((1, T), lambda t, bi, bj: (0, bj[t])),   # col ||.||^2
            ],
            out_specs=pl.BlockSpec((T, T), lambda t, bi, bj: (bi[t], bj[t])),
        ),
        compiler_params=pltpu.CompilerParams(
            dimension_semantics=("arbitrary",),
        ),
    )(bi_tbl, bj_tbl, X_pad, X_pad, rsq, csq)

    # Glue: extract the condensed vector in torch.pdist order (i<j, row-major)
    # and normalize by its sum. Only upper-triangular blocks are ever read, so
    # the unvisited (strictly-lower) blocks of q_mat are never touched.
    # TODO(synk): for very large N, replace this triu gather with a tiled
    # extraction to avoid the extra dense HBM read (pure indexing glue).
    iu, ju = jnp.triu_indices(N, k=1)
    pd = q_mat[iu, ju]
    x_probs = pd / jnp.sum(pd)
    return x_probs, X


def _reference(X):
    # pure-JAX reference of the PyTorch forward
    d2 = jnp.sum((X[:, None, :] - X[None, :, :]) ** 2, axis=-1)
    d = jnp.sqrt(jnp.maximum(d2, 0.0))
    iu, ju = jnp.triu_indices(X.shape[0], k=1)
    pd = 1.0 / (1.0 + d[iu, ju])
    return pd / jnp.sum(pd)


if __name__ == "__main__":
    # Small but multi-block: N=200 with tile=128 -> n_pad=256, 2x2 blocks,
    # 3 upper-triangular block pairs on the grid.
    n_samples, n_features = 200, 16

    key = jax.random.PRNGKey(0)
    kX, kx = jax.random.split(key)
    # deterministic stand-in for torch.randn(n_samples, n_features)
    X = jax.random.normal(kX, (n_samples, n_features), dtype=jnp.float32)
    # dummy forward input (ignored by the module, kept for API parity)
    x_in = jax.random.normal(kx, (4, n_features), dtype=jnp.float32)

    x_probs, X_out = tsne_nn_forward(x_in, X)
    jax.block_until_ready((x_probs, X_out))

    ref = _reference(X)
    assert x_probs.shape == (n_samples * (n_samples - 1) // 2,)
    np.testing.assert_allclose(np.asarray(x_probs), np.asarray(ref),
                               rtol=1e-5, atol=1e-6)
    np.testing.assert_allclose(np.asarray(X_out), np.asarray(X))
    assert abs(float(jnp.sum(x_probs)) - 1.0) < 1e-4

    print("KERNEL_OK")
</pallas_src>

<mosaic_0001>
module attributes {stable_mosaic.version = 11 : i64} {
  func.func @_tsne_block_kernel(%arg0: i32, %arg1: memref<3xi32, #tpu.memory_space<smem>>, %arg2: memref<3xi32, #tpu.memory_space<smem>>, %arg3: memref<128x16xf32, #tpu.memory_space<vmem>>, %arg4: memref<128x16xf32, #tpu.memory_space<vmem>>, %arg5: memref<128x1xf32, #tpu.memory_space<vmem>>, %arg6: memref<1x128xf32, #tpu.memory_space<vmem>>, %arg7: memref<128x128xf32, #tpu.memory_space<vmem>>) attributes {dimension_semantics = [#tpu.dimension_semantics<arbitrary>], iteration_bounds = array<i64: 3>, scalar_prefetch = 2 : i64, scratch_operands = 0 : i64, tpu.core_type = #tpu.core_type<tc>, window_params = [{transform_indices = @transform_0, window_bounds = array<i64: 128, 16>}, {transform_indices = @transform_1, window_bounds = array<i64: 128, 16>}, {transform_indices = @transform_2, window_bounds = array<i64: 128, 1>}, {transform_indices = @transform_3, window_bounds = array<i64: 1, 128>}, {transform_indices = @transform_4, window_bounds = array<i64: 128, 128>}]} {
    %0 = arith.index_cast %arg0 : i32 to index
    %1 = memref.load %arg1[%0] : memref<3xi32, #tpu.memory_space<smem>>
    %2 = arith.index_cast %arg0 : i32 to index
    %3 = memref.load %arg2[%2] : memref<3xi32, #tpu.memory_space<smem>>
    %c0 = arith.constant 0 : index
    %c0_0 = arith.constant 0 : index
    %4 = vector.load %arg3[%c0, %c0_0] : memref<128x16xf32, #tpu.memory_space<vmem>>, vector<128x16xf32>
    %c0_1 = arith.constant 0 : index
    %c0_2 = arith.constant 0 : index
    %5 = vector.load %arg4[%c0_1, %c0_2] : memref<128x16xf32, #tpu.memory_space<vmem>>, vector<128x16xf32>
    %cst = arith.constant -2.000000e+00 : f32
    %6 = vector.broadcast %cst : f32 to vector<128x16xf32>
    %7 = arith.mulf %4, %6 : vector<128x16xf32>
    %cst_3 = arith.constant dense<0.000000e+00> : vector<128x128xf32>
    %8 = tpu.matmul %7, %5, %cst_3 {dimension_numbers = #tpu.dot_dimension_numbers<[1], [1], [0], [0], [0, 0, 1, 0], [], []>} : vector<128x16xf32>, vector<128x16xf32>, vector<128x128xf32> -> vector<128x128xf32>
    %c0_4 = arith.constant 0 : index
    %c0_5 = arith.constant 0 : index
    %9 = vector.load %arg5[%c0_4, %c0_5] : memref<128x1xf32, #tpu.memory_space<vmem>>, vector<128x1xf32>
    %c0_6 = arith.constant 0 : index
    %c0_7 = arith.constant 0 : index
    %10 = vector.load %arg6[%c0_6, %c0_7] : memref<1x128xf32, #tpu.memory_space<vmem>>, vector<1x128xf32>
    %11 = vector.broadcast %9 : vector<128x1xf32> to vector<128x128xf32>
    %12 = vector.broadcast %10 : vector<1x128xf32> to vector<128x128xf32>
    %13 = arith.addf %11, %12 : vector<128x128xf32>
    %14 = arith.addf %13, %8 : vector<128x128xf32>
    %cst_8 = arith.constant 0.000000e+00 : f32
    %15 = vector.broadcast %cst_8 : f32 to vector<128x128xf32>
    %16 = arith.maximumf %14, %15 : vector<128x128xf32>
    %17 = math.sqrt %16 : vector<128x128xf32>
    %cst_9 = arith.constant 1.000000e+00 : f32
    %18 = vector.broadcast %cst_9 : f32 to vector<128x128xf32>
    %19 = arith.addf %18, %17 : vector<128x128xf32>
    %cst_10 = arith.constant 1.000000e+00 : f32
    %20 = vector.broadcast %cst_10 : f32 to vector<128x128xf32>
    %21 = arith.divf %20, %19 : vector<128x128xf32>
    %22 = tpu.iota {dimensions = array<i32: 0>} : vector<128x128xi32>
    %c128_i32 = arith.constant 128 : i32
    %23 = arith.muli %1, %c128_i32 : i32
    %24 = vector.broadcast %23 : i32 to vector<128x128xi32>
    %25 = arith.addi %22, %24 : vector<128x128xi32>
    %26 = tpu.iota {dimensions = array<i32: 1>} : vector<128x128xi32>
    %c128_i32_11 = arith.constant 128 : i32
    %27 = arith.muli %3, %c128_i32_11 : i32
    %28 = vector.broadcast %27 : i32 to vector<128x128xi32>
    %29 = arith.addi %26, %28 : vector<128x128xi32>
    %30 = arith.cmpi slt, %25, %29 : vector<128x128xi32>
    %c200_i32 = arith.constant 200 : i32
    %31 = vector.broadcast %c200_i32 : i32 to vector<128x128xi32>
    %32 = arith.cmpi slt, %29, %31 : vector<128x128xi32>
    %33 = arith.andi %30, %32 : vector<128x128xi1>
    %cst_12 = arith.constant 0.000000e+00 : f32
    %34 = vector.broadcast %cst_12 : f32 to vector<128x128xf32>
    %35 = arith.select %33, %21, %34 : vector<128x128xi1>, vector<128x128xf32>
    %c0_13 = arith.constant 0 : index
    %c0_14 = arith.constant 0 : index
    %36 = vector.load %arg7[%c0_13, %c0_14] : memref<128x128xf32, #tpu.memory_space<vmem>>, vector<128x128xf32>
    tpu.vector_store %arg7[%c0_13, %c0_14], %35 {strides = array<i32>} : memref<128x128xf32, #tpu.memory_space<vmem>>, vector<128x128xf32>,
    return
  }
  func.func @transform_0(%arg0: i32, %arg1: memref<3xi32, #tpu.memory_space<smem>>, %arg2: memref<3xi32, #tpu.memory_space<smem>>) -> (i32, i32) {
    %0 = arith.index_cast %arg0 : i32 to index
    %1 = memref.load %arg1[%0] : memref<3xi32, #tpu.memory_space<smem>>
    %c0_i32 = arith.constant 0 : i32
    %c0_i32_0 = arith.constant 0 : i32
    return %1, %c0_i32 : i32, i32
  }
  func.func @transform_1(%arg0: i32, %arg1: memref<3xi32, #tpu.memory_space<smem>>, %arg2: memref<3xi32, #tpu.memory_space<smem>>) -> (i32, i32) {
    %0 = arith.index_cast %arg0 : i32 to index
    %1 = memref.load %arg2[%0] : memref<3xi32, #tpu.memory_space<smem>>
    %c0_i32 = arith.constant 0 : i32
    %c0_i32_0 = arith.constant 0 : i32
    return %1, %c0_i32 : i32, i32
  }
  func.func @transform_2(%arg0: i32, %arg1: memref<3xi32, #tpu.memory_space<smem>>, %arg2: memref<3xi32, #tpu.memory_space<smem>>) -> (i32, i32) {
    %0 = arith.index_cast %arg0 : i32 to index
    %1 = memref.load %arg1[%0] : memref<3xi32, #tpu.memory_space<smem>>
    %c0_i32 = arith.constant 0 : i32
    %c0_i32_0 = arith.constant 0 : i32
    return %1, %c0_i32 : i32, i32
  }
  func.func @transform_3(%arg0: i32, %arg1: memref<3xi32, #tpu.memory_space<smem>>, %arg2: memref<3xi32, #tpu.memory_space<smem>>) -> (i32, i32) {
    %0 = arith.index_cast %arg0 : i32 to index
    %1 = memref.load %arg2[%0] : memref<3xi32, #tpu.memory_space<smem>>
    %c0_i32 = arith.constant 0 : i32
    %c0_i32_0 = arith.constant 0 : i32
    return %c0_i32, %1 : i32, i32
  }
  func.func @transform_4(%arg0: i32, %arg1: memref<3xi32, #tpu.memory_space<smem>>, %arg2: memref<3xi32, #tpu.memory_space<smem>>) -> (i32, i32) {
    %0 = arith.index_cast %arg0 : i32 to index
    %1 = memref.load %arg1[%0] : memref<3xi32, #tpu.memory_space<smem>>
    %2 = arith.index_cast %arg0 : i32 to index
    %3 = memref.load %arg2[%2] : memref<3xi32, #tpu.memory_space<smem>>
    %c0_i32 = arith.constant 0 : i32
    return %1, %3 : i32, i32
  }
}

</mosaic_0001>

<llo_original>
// kernel: tpu_custom_call.1
$region0: #{tpu_custom_call.1}
  #allocation0 [shape = 'u32[]', space=smem, size = 0x4, offset = 0x4, fixed_abs, tag = 'smem constant byte address 0x4 - core index']
  #allocation1 [shape = 'u32[144,128]{1,0:T(1,128)}', space=vmem, size = 0x12000, scoped, tag = 'internal scratch']
  #allocation2 [shape = 's32[1]{0}', space=sflag, size = 0x4, scoped, tag = 'scoped memory for tpu_custom_call.1']
  #allocation3 [shape = 'u8[512]{0}', space=smem, size = 0x200, scoped, tag = 'prefetched SMEM operand 0']
  #allocation4 [shape = 'u8[512]{0}', space=smem, size = 0x200, scoped, tag = 'prefetched SMEM operand 1']
  %s0 = inlined_call_operand.vmem [shape: s32[3], index: 0, kind: input, shape index: {}]
  %s1 = inlined_call_operand.vmem [shape: s32[3], index: 1, kind: input, shape index: {}]
  %s2 = inlined_call_operand.vmem [shape: f32[256,16], index: 2, kind: input, shape index: {}]
  %s3 = inlined_call_operand.vmem [shape: f32[256,16], index: 3, kind: input, shape index: {}]
  %s4 = inlined_call_operand.vmem [shape: f32[256,1], index: 4, kind: input, shape index: {}]
  %s5 = inlined_call_operand.vmem [shape: f32[1,256], index: 5, kind: input, shape index: {}]
  %s6 = inlined_call_operand.hbm [shape: f32[256,256], index: 6, kind: output, shape index: {}]
  %s7 = sld [smem:[#allocation0]]
  $region49: #{tpu_custom_call.1} parent=0
    _
  %s9 = ssub.s32 1, %s7
  %s10 = scalar_select 0, %s9, %s7
  %s11 = sshll.u32 %s0, 4
  %s12 = int_to_ptr.vmem [resolvable:$true] %s11
  %14 = dma.vmem_to_smem %s12, 16, [#allocation3], [#allocation2]
  %s15 = sshll.u32 %s1, 4
  %s16 = int_to_ptr.vmem [resolvable:$true] %s15
  %18 = dma.vmem_to_smem %s16, 16, [#allocation4], [#allocation2]
  %19 = dma.done [#allocation2], 32
  %20 = sfence
  $region1: #{tpu_custom_call.1} parent=0
    #allocation5 [shape = 'u8[131072]{0}', space=vmem, size = 0x20000, scoped, tag = 'output window, operand 0']
    #allocation6 [shape = 's32[2]{0}', space=sflag, size = 0x8, scoped, tag = 'scoped memory for tpu_custom_call.1']
    %21 = vsyncpa [#allocation6], 0
    %s22 = scalar_lea.sflag [#allocation6], 1
    %23 = vsyncpa %s22, 0
    loop: start=0, step=1, limit=5
    $region2: #{tpu_custom_call.1} parent=1 // loop_pre_header
      _
    $region3: #{tpu_custom_call.1} parent=1 // loop_header
      %s25 = sphi 0, %s29
      %p26 = scmp.ge.s32.totalorder %s25, 5
      %s37 = sphi 0, %s39
      %s40 = sphi 0, %s37
      %s41 = sphi 0, %s40
      %s57 = sphi 0, %s41
      %s65 = sphi 0, %s67
      %s68 = sphi 0, %s65
      %s69 = sphi 0, %s68
      %s85 = sphi 0, %s69
      %s93 = sphi 0, %s95
      %s96 = sphi 0, %s93
      %s97 = sphi 0, %s96
      %s113 = sphi 0, %s97
      %s121 = sphi 0, %s123
      %s124 = sphi 0, %s121
      %s125 = sphi 0, %s124
      %s141 = sphi 0, %s125
      %s153 = sphi 0, %s155
      %s156 = sphi 0, %s153
      %s157 = sphi 0, %s156
      %s173 = sphi 0, %s157
    $region4: #{tpu_custom_call.1} parent=1 // loop_header_branch
      %28 = sbr.rel (%p26) target = $region8
    $region5: #{tpu_custom_call.1} parent=1 // loop_body
      %s30 = ssub.s32 %s25, 1
      %s31 = ssub.s32 %s25, 2
      %s32 = sadd.s32 %s25, 1
      %s33 = sld [smem:[#allocation3 + %s25]]
      %s34 = sld [smem:[#allocation3 + %s32]]
      %s35 = ssub.s32 %s33, %s34
      %p36 = scmp.eq.s32.totalorder %s35, 0
      %s38 = sadd.s32 %s37, 1
      %s39 = scalar_select %p36, %s37, %s38
      %p42 = pneg %p36
      %p43 = scmp.eq.s32.totalorder %s25, 2
      %p44 = por %p42, %p43
      %p45 = scmp.ne.s32.totalorder %s37, %s40
      %p46 = scmp.eq.s32.totalorder %s25, 0
      %p47 = por %p45, %p46
      %p48 = scmp.ne.s32.totalorder %s37, %s40
      %p49 = scmp.eq.s32.totalorder %s30, 2
      %p50 = por %p48, %p49
      %p51 = scmp.ne.s32.totalorder %s40, %s41
      %p52 = scmp.eq.s32.totalorder %s30, 0
      %p53 = por %p51, %p52
      %p54 = scmp.ne.s32.totalorder %s40, %s41
      %p55 = scmp.eq.s32.totalorder %s31, 2
      %p56 = por %p54, %p55
      %p58 = scmp.ne.s32.totalorder %s41, %s57
      %p59 = scmp.eq.s32.totalorder %s31, 0
      %p60 = por %p58, %p59
      %s61 = sld [smem:[#allocation4 + %s25]]
      %s62 = sld [smem:[#allocation4 + %s32]]
      %s63 = ssub.s32 %s61, %s62
      %p64 = scmp.eq.s32.totalorder %s63, 0
      %s66 = sadd.s32 %s65, 1
      %s67 = scalar_select %p64, %s65, %s66
      %p70 = pneg %p64
      %p71 = scmp.eq.s32.totalorder %s25, 2
      %p72 = por %p70, %p71
      %p73 = scmp.ne.s32.totalorder %s65, %s68
      %p74 = scmp.eq.s32.totalorder %s25, 0
      %p75 = por %p73, %p74
      %p76 = scmp.ne.s32.totalorder %s65, %s68
      %p77 = scmp.eq.s32.totalorder %s30, 2
      %p78 = por %p76, %p77
      %p79 = scmp.ne.s32.totalorder %s68, %s69
      %p80 = scmp.eq.s32.totalorder %s30, 0
      %p81 = por %p79, %p80
      %p82 = scmp.ne.s32.totalorder %s68, %s69
      %p83 = scmp.eq.s32.totalorder %s31, 2
      %p84 = por %p82, %p83
      %p86 = scmp.ne.s32.totalorder %s69, %s85
      %p87 = scmp.eq.s32.totalorder %s31, 0
      %p88 = por %p86, %p87
      %s89 = sld [smem:[#allocation3 + %s25]]
      %s90 = sld [smem:[#allocation3 + %s32]]
      %s91 = ssub.s32 %s89, %s90
      %p92 = scmp.eq.s32.totalorder %s91, 0
      %s94 = sadd.s32 %s93, 1
      %s95 = scalar_select %p92, %s93, %s94
      %p98 = pneg %p92
      %p99 = scmp.eq.s32.totalorder %s25, 2
      %p100 = por %p98, %p99
      %p101 = scmp.ne.s32.totalorder %s93, %s96
      %p102 = scmp.eq.s32.totalorder %s25, 0
      %p103 = por %p101, %p102
      %p104 = scmp.ne.s32.totalorder %s93, %s96
      %p105 = scmp.eq.s32.totalorder %s30, 2
      %p106 = por %p104, %p105
      %p107 = scmp.ne.s32.totalorder %s96, %s97
      %p108 = scmp.eq.s32.totalorder %s30, 0
      %p109 = por %p107, %p108
      %p110 = scmp.ne.s32.totalorder %s96, %s97
      %p111 = scmp.eq.s32.totalorder %s31, 2
      %p112 = por %p110, %p111
      %p114 = scmp.ne.s32.totalorder %s97, %s113
      %p115 = scmp.eq.s32.totalorder %s31, 0
      %p116 = por %p114, %p115
      %s117 = sld [smem:[#allocation4 + %s25]]
      %s118 = sld [smem:[#allocation4 + %s32]]
      %s119 = ssub.s32 %s117, %s118
      %p120 = scmp.eq.s32.totalorder %s119, 0
      %s122 = sadd.s32 %s121, 1
      %s123 = scalar_select %p120, %s121, %s122
      %p126 = pneg %p120
      %p127 = scmp.eq.s32.totalorder %s25, 2
      %p128 = por %p126, %p127
      %p129 = scmp.ne.s32.totalorder %s121, %s124
      %p130 = scmp.eq.s32.totalorder %s25, 0
      %p131 = por %p129, %p130
      %p132 = scmp.ne.s32.totalorder %s121, %s124
      %p133 = scmp.eq.s32.totalorder %s30, 2
      %p134 = por %p132, %p133
      %p135 = scmp.ne.s32.totalorder %s124, %s125
      %p136 = scmp.eq.s32.totalorder %s30, 0
      %p137 = por %p135, %p136
      %p138 = scmp.ne.s32.totalorder %s124, %s125
      %p139 = scmp.eq.s32.totalorder %s31, 2
      %p140 = por %p138, %p139
      %p142 = scmp.ne.s32.totalorder %s125, %s141
      %p143 = scmp.eq.s32.totalorder %s31, 0
      %p144 = por %p142, %p143
      %s145 = sld [smem:[#allocation3 + %s25]]
      %s146 = sld [smem:[#allocation4 + %s25]]
      %s147 = sld [smem:[#allocation3 + %s32]]
      %s148 = sld [smem:[#allocation4 + %s32]]
      %s149 = ssub.s32 %s145, %s147
      %s150 = ssub.s32 %s146, %s148
      %s151 = sor.u32 %s149, %s150
      %p152 = scmp.eq.s32.totalorder %s151, 0
      %s154 = sadd.s32 %s153, 1
      %s155 = scalar_select %p152, %s153, %s154
      %p158 = pneg %p152
      %p159 = scmp.eq.s32.totalorder %s25, 2
      %p160 = por %p158, %p159
      %p161 = scmp.ne.s32.totalorder %s153, %s156
      %p162 = scmp.eq.s32.totalorder %s25, 0
      %p163 = por %p161, %p162
      %p164 = scmp.ne.s32.totalorder %s153, %s156
      %p165 = scmp.eq.s32.totalorder %s30, 2
      %p166 = por %p164, %p165
      %p167 = scmp.ne.s32.totalorder %s156, %s157
      %p168 = scmp.eq.s32.totalorder %s30, 0
      %p169 = por %p167, %p168
      %p170 = scmp.ne.s32.totalorder %s156, %s157
      %p171 = scmp.eq.s32.totalorder %s31, 2
      %p172 = por %p170, %p171
      %p174 = scmp.ne.s32.totalorder %s157, %s173
      %p175 = scmp.eq.s32.totalorder %s31, 0
      %p176 = por %p174, %p175
      %p177 = scmp.le.s32.totalorder 1, %s25
      %p178 = scmp.lt.s32.totalorder %s25, 4
      %p179 = pnand %p177, %p178
      %p180 = pneg %p179
      // Predicated region
      $region9: #{tpu_custom_call.1} parent=5 // pred_check
        _
      $region10: #{tpu_custom_call.1} parent=5 // pred_check_branch
        %182 = sbr.rel (%p179) target = $region12
      $region11: #{tpu_custom_call.1} parent=5 // pred_region
        %s183 = ssub.s32 %s25, 1
      $region12: #{tpu_custom_call.1} parent=5 // pred_fallthru
        _
      %p184 = scmp.lt.s32.totalorder %s25, 3
      // Predicated region
      $region13: #{tpu_custom_call.1} parent=5 // pred_check
        %p185 = pneg %p184
      $region14: #{tpu_custom_call.1} parent=5 // pred_check_branch
        %187 = sbr.rel (%p185) target = $region16
      $region15: #{tpu_custom_call.1} parent=5 // pred_region
        // Predicated region
        $region17: #{tpu_custom_call.1} parent=15 // pred_check
          %p188 = pneg %p47
        $region18: #{tpu_custom_call.1} parent=15 // pred_check_branch
          %190 = sbr.rel (%p188) target = $region20
        $region19: #{tpu_custom_call.1} parent=15 // pred_region
          %s191 = sld [smem:[#allocation3 + %s25]]
          %s192 = smul.u32 16, %s191
          %p193 = scmp.lt.s32.totalorder %s192, 31
          %s194 = scalar_select %p193, %s192, 31
          %s195 = smul.addr %s194, 8
          %s196 = scalar_lea.vmem %s2, %s195
          %s197 = sld [smem:[#allocation3 + %s25]]
          %s198 = smul.u32 16, %s197
        $region20: #{tpu_custom_call.1} parent=15 // pred_fallthru
          _
        // Predicated region
        $region21: #{tpu_custom_call.1} parent=15 // pred_check
          %p199 = pneg %p75
        $region22: #{tpu_custom_call.1} parent=15 // pred_check_branch
          %201 = sbr.rel (%p199) target = $region24
        $region23: #{tpu_custom_call.1} parent=15 // pred_region
          %s202 = sld [smem:[#allocation4 + %s25]]
          %s203 = smul.u32 16, %s202
          %p204 = scmp.lt.s32.totalorder %s203, 31
          %s205 = scalar_select %p204, %s203, 31
          %s206 = smul.addr %s205, 8
          %s207 = scalar_lea.vmem %s3, %s206
          %s208 = sld [smem:[#allocation4 + %s25]]
          %s209 = smul.u32 16, %s208
        $region24: #{tpu_custom_call.1} parent=15 // pred_fallthru
          _
        // Predicated region
        $region25: #{tpu_custom_call.1} parent=15 // pred_check
          %p210 = pneg %p103
        $region26: #{tpu_custom_call.1} parent=15 // pred_check_branch
          %212 = sbr.rel (%p210) target = $region28
        $region27: #{tpu_custom_call.1} parent=15 // pred_region
          %s213 = sld [smem:[#allocation3 + %s25]]
          %s214 = smul.u32 16, %s213
          %p215 = scmp.lt.s32.totalorder %s214, 31
          %s216 = scalar_select %p215, %s214, 31
          %s217 = smul.addr %s216, 8
          %s218 = scalar_lea.vmem %s4, %s217
          %s219 = sld [smem:[#allocation3 + %s25]]
          %s220 = smul.u32 16, %s219
        $region28: #{tpu_custom_call.1} parent=15 // pred_fallthru
          _
        // Predicated region
        $region29: #{tpu_custom_call.1} parent=15 // pred_check
          %p221 = pneg %p131
        $region30: #{tpu_custom_call.1} parent=15 // pred_check_branch
          %223 = sbr.rel (%p221) target = $region32
        $region31: #{tpu_custom_call.1} parent=15 // pred_region
          %s224 = sld [smem:[#allocation4 + %s25]]
          %p225 = scmp.lt.s32.totalorder %s224, 1
          %s226 = scalar_select %p225, %s224, 1
          %s227 = scalar_lea.vmem %s5, %s226
          %s228 = sld [smem:[#allocation4 + %s25]]
        $region32: #{tpu_custom_call.1} parent=15 // pred_fallthru
          _
      $region16: #{tpu_custom_call.1} parent=5 // pred_fallthru
        _
      %p229 = scmp.le.s32.totalorder 1, %s25
      %p230 = scmp.lt.s32.totalorder %s25, 4
      %p231 = pnand %p229, %p230
      %p232 = pneg %p231
      // Predicated region
      $region33: #{tpu_custom_call.1} parent=5 // pred_check
        _
      $region34: #{tpu_custom_call.1} parent=5 // pred_check_branch
        %234 = sbr.rel (%p231) target = $region36
      $region35: #{tpu_custom_call.1} parent=5 // pred_region
        %s235 = ssub.s32 %s25, 1
        %s236 = sld [smem:[#allocation3 + %s30]]
        %s237 = smul.u32 16, %s236
        %p238 = scmp.lt.s32.totalorder %s237, 31
        %s239 = scalar_select %p238, %s237, 31
        %s240 = smul.addr %s239, 8
        %s241 = scalar_lea.vmem %s2, %s240
        %p242 = pneg %p53
        %p243 = pneg %p50
        %s244 = sld [smem:[#allocation4 + %s30]]
        %s245 = smul.u32 16, %s244
        %p246 = scmp.lt.s32.totalorder %s245, 31
        %s247 = scalar_select %p246, %s245, 31
        %s248 = smul.addr %s247, 8
        %s249 = scalar_lea.vmem %s3, %s248
        %p250 = pneg %p81
        %p251 = pneg %p78
        %s252 = sld [smem:[#allocation3 + %s30]]
        %s253 = smul.u32 16, %s252
        %p254 = scmp.lt.s32.totalorder %s253, 31
        %s255 = scalar_select %p254, %s253, 31
        %s256 = smul.addr %s255, 8
        %s257 = scalar_lea.vmem %s4, %s256
        %p258 = pneg %p109
        %p259 = pneg %p106
        %s260 = sld [smem:[#allocation4 + %s30]]
        %p261 = scmp.lt.s32.totalorder %s260, 1
        %s262 = scalar_select %p261, %s260, 1
        %s263 = scalar_lea.vmem %s5, %s262
        %p264 = pneg %p137
        %p265 = pneg %p134
        %p266 = pneg %p169
        %p267 = pneg %p166
        %s268 = sand.u32 %s156, 1
        %s269 = scalar_lea.sflag [#allocation6], %s268
        %s270 = sand.u32 %s156, 1
        %s271 = smul.addr %s270, 128
        %s272 = scalar_lea.vmem [#allocation5], %s271
        %s273 = sld [smem:[#allocation3 + %s30]]
        %s274 = smul.u32 16, %s273
        %p275 = scmp.lt.s32.totalorder %s274, 31
        %s276 = scalar_select %p275, %s274, 31
        %s277 = smul.addr %s276, 8
        %s278 = scalar_lea.vmem %s2, %s277
        %s279 = sld [smem:[#allocation3 + %s30]]
        %s280 = smul.u32 16, %s279
        %s281 = sld [smem:[#allocation4 + %s30]]
        %s282 = smul.u32 16, %s281
        %p283 = scmp.lt.s32.totalorder %s282, 31
        %s284 = scalar_select %p283, %s282, 31
        %s285 = smul.addr %s284, 8
        %s286 = scalar_lea.vmem %s3, %s285
        %s287 = sld [smem:[#allocation4 + %s30]]
        %s288 = smul.u32 16, %s287
        %s289 = sld [smem:[#allocation3 + %s30]]
        %s290 = smul.u32 16, %s289
        %p291 = scmp.lt.s32.totalorder %s290, 31
        %s292 = scalar_select %p291, %s290, 31
        %s293 = smul.addr %s292, 8
        %s294 = scalar_lea.vmem %s4, %s293
        %s295 = sld [smem:[#allocation3 + %s30]]
        %s296 = smul.u32 16, %s295
        %s297 = sld [smem:[#allocation4 + %s30]]
        %p298 = scmp.lt.s32.totalorder %s297, 1
        %s299 = scalar_select %p298, %s297, 1
        %s300 = scalar_lea.vmem %s5, %s299
        %s301 = sld [smem:[#allocation4 + %s30]]
        %s302 = sld [smem:[#allocation3 + %s30]]
        %s303 = sld [smem:[#allocation4 + %s30]]
        %s304 = smul.u32 16, %s302
        %s305 = sld [smem:[#allocation3 + %s30]]
        %s306 = sld [smem:[#allocation4 + %s30]]
        %v307 = vld [vmem:[%s278] sm:$0xff]
        %v308 = vld [vmem:[%s278 + $0x8] sm:$0xff]
        %v309 = vld [vmem:[%s278 + $0x10] sm:$0xff]
        %v310 = vld [vmem:[%s278 + $0x18] sm:$0xff]
        %v311 = vld [vmem:[%s278 + $0x20] sm:$0xff]
        %v312 = vld [vmem:[%s278 + $0x28] sm:$0xff]
        %v313 = vld [vmem:[%s278 + $0x30] sm:$0xff]
        %v314 = vld [vmem:[%s278 + $0x38] sm:$0xff]
        %v315 = vld [vmem:[%s278 + $0x40] sm:$0xff]
        %v316 = vld [vmem:[%s278 + $0x48] sm:$0xff]
        %v317 = vld [vmem:[%s278 + $0x50] sm:$0xff]
        %v318 = vld [vmem:[%s278 + $0x58] sm:$0xff]
        %v319 = vld [vmem:[%s278 + $0x60] sm:$0xff]
        %v320 = vld [vmem:[%s278 + $0x68] sm:$0xff]
        %v321 = vld [vmem:[%s278 + $0x70] sm:$0xff]
        %v322 = vld [vmem:[%s278 + $0x78] sm:$0xff]
        %v323 = vld [vmem:[%s286] sm:$0xff]
        %v324 = vld [vmem:[%s286 + $0x8] sm:$0xff]
        %v325 = vld [vmem:[%s286 + $0x10] sm:$0xff]
        %v326 = vld [vmem:[%s286 + $0x18] sm:$0xff]
        %v327 = vld [vmem:[%s286 + $0x20] sm:$0xff]
        %v328 = vld [vmem:[%s286 + $0x28] sm:$0xff]
        %v329 = vld [vmem:[%s286 + $0x30] sm:$0xff]
        %v330 = vld [vmem:[%s286 + $0x38] sm:$0xff]
        %v331 = vld [vmem:[%s286 + $0x40] sm:$0xff]
        %v332 = vld [vmem:[%s286 + $0x48] sm:$0xff]
        %v333 = vld [vmem:[%s286 + $0x50] sm:$0xff]
        %v334 = vld [vmem:[%s286 + $0x58] sm:$0xff]
        %v335 = vld [vmem:[%s286 + $0x60] sm:$0xff]
        %v336 = vld [vmem:[%s286 + $0x68] sm:$0xff]
        %v337 = vld [vmem:[%s286 + $0x70] sm:$0xff]
        %v338 = vld [vmem:[%s286 + $0x78] sm:$0xff]
        %v339 = vmul.f32 %v307, -2.0
        %v340 = vmul.f32 %v308, -2.0
        %v341 = vmul.f32 %v309, -2.0
        %v342 = vmul.f32 %v310, -2.0
        %v343 = vmul.f32 %v311, -2.0
        %v344 = vmul.f32 %v312, -2.0
        %v345 = vmul.f32 %v313, -2.0
        %v346 = vmul.f32 %v314, -2.0
        %v347 = vmul.f32 %v315, -2.0
        %v348 = vmul.f32 %v316, -2.0
        %v349 = vmul.f32 %v317, -2.0
        %v350 = vmul.f32 %v318, -2.0
        %v351 = vmul.f32 %v319, -2.0
        %v352 = vmul.f32 %v320, -2.0
        %v353 = vmul.f32 %v321, -2.0
        %v354 = vmul.f32 %v322, -2.0
        %vm355 = vcmask 130048
        %v357 = vsel %vm355, %v339, 0
        %v360 = vsel %vm355, %v340, 0
        %v363 = vsel %vm355, %v341, 0
        %v366 = vsel %vm355, %v342, 0
        %v369 = vsel %vm355, %v343, 0
        %v372 = vsel %vm355, %v344, 0
        %v375 = vsel %vm355, %v345, 0
        %v378 = vsel %vm355, %v346, 0
        %v381 = vsel %vm355, %v347, 0
        %v384 = vsel %vm355, %v348, 0
        %v387 = vsel %vm355, %v349, 0
        %v390 = vsel %vm355, %v350, 0
        %v393 = vsel %vm355, %v351, 0
        %v396 = vsel %vm355, %v352, 0
        %v399 = vsel %vm355, %v353, 0
        %v402 = vsel %vm355, %v354, 0
        %v405 = vsel %vm355, %v323, 0
        %v408 = vsel %vm355, %v324, 0
        %v411 = vsel %vm355, %v325, 0
        %v414 = vsel %vm355, %v326, 0
        %v417 = vsel %vm355, %v327, 0
        %v420 = vsel %vm355, %v328, 0
        %v423 = vsel %vm355, %v329, 0
        %v426 = vsel %vm355, %v330, 0
        %v429 = vsel %vm355, %v331, 0
        %v432 = vsel %vm355, %v332, 0
        %v435 = vsel %vm355, %v333, 0
        %v438 = vsel %vm355, %v334, 0
        %v441 = vsel %vm355, %v335, 0
        %v444 = vsel %vm355, %v336, 0
        %v447 = vsel %vm355, %v337, 0
        %v450 = vsel %vm355, %v338, 0
        %452 = vmatprep.subr.mxu0 0.0
        %453 = vmatpush1.xpose.msra.mxu0 %v405
        %454 = vmatprep.subr.mxu0 0.0
        %455 = vmatpush1.xpose.msra.mxu0 %v408
        %456 = vmatprep.subr.mxu0 0.0
        %457 = vmatpush1.xpose.msra.mxu0 %v411
        %458 = vmatprep.subr.mxu0 0.0
        %459 = vmatpush1.xpose.msra.mxu0 %v414
        %460 = vmatprep.subr.mxu0 0.0
        %461 = vmatpush1.xpose.msra.mxu0 %v417
        %462 = vmatprep.subr.mxu0 0.0
        %463 = vmatpush1.xpose.msra.mxu0 %v420
        %464 = vmatprep.subr.mxu0 0.0
        %465 = vmatpush1.xpose.msra.mxu0 %v423
        %466 = vmatprep.subr.mxu0 0.0
        %467 = vmatpush1.xpose.msra.mxu0 %v426
        %468 = vmatprep.subr.mxu0 0.0
        %469 = vmatpush1.xpose.msra.mxu0 %v429
        %470 = vmatprep.subr.mxu0 0.0
        %471 = vmatpush1.xpose.msra.mxu0 %v432
        %472 = vmatprep.subr.mxu0 0.0
        %473 = vmatpush1.xpose.msra.mxu0 %v435
        %474 = vmatprep.subr.mxu0 0.0
        %475 = vmatpush1.xpose.msra.mxu0 %v438
        %476 = vmatprep.subr.mxu0 0.0
        %477 = vmatpush1.xpose.msra.mxu0 %v441
        %478 = vmatprep.subr.mxu0 0.0
        %479 = vmatpush1.xpose.msra.mxu0 %v444
        %480 = vmatprep.subr.mxu0 0.0
        %481 = vmatpush1.xpose.msra.mxu0 %v447
        %482 = vmatprep.subr.mxu0 0.0
        %483 = vmatpush1.xpose.msra.mxu0 %v450
        %484 = vmatprep.subr.mxu0 0.0
        %485 = vmatpush1.xpose.msra.mxu0 0.0
        %486 = vmatprep.subr.mxu0 0.0
        %487 = vmatpush1.xpose.msra.mxu0 0.0
        %488 = vmatprep.subr.mxu0 0.0
        %489 = vmatpush1.xpose.msra.mxu0 0.0
        %490 = vmatprep.subr.mxu0 0.0
        %491 = vmatpush1.xpose.msra.mxu0 0.0
        %492 = vmatprep.subr.mxu0 0.0
        %493 = vmatpush1.xpose.msra.mxu0 0.0
        %494 = vmatprep.subr.mxu0 0.0
        %495 = vmatpush1.xpose.msra.mxu0 0.0
        %496 = vmatprep.subr.mxu0 0.0
        %497 = vmatpush1.xpose.msra.mxu0 0.0
        %498 = vmatprep.subr.mxu0 0.0
        %499 = vmatpush1.xpose.msra.mxu0 0.0
        %500 = vmatprep.subr.mxu0 0.0
        %501 = vmatpush1.xpose.msra.mxu0 0.0
        %502 = vmatprep.subr.mxu0 0.0
        %503 = vmatpush1.xpose.msra.mxu0 0.0
        %504 = vmatprep.subr.mxu0 0.0
        %505 = vmatpush1.xpose.msra.mxu0 0.0
        %506 = vmatprep.subr.mxu0 0.0
        %507 = vmatpush1.xpose.msra.mxu0 0.0
        %508 = vmatprep.subr.mxu0 0.0
        %509 = vmatpush1.xpose.msra.mxu0 0.0
        %510 = vmatprep.subr.mxu0 0.0
        %511 = vmatpush1.xpose.msra.mxu0 0.0
        %512 = vmatprep.subr.mxu0 0.0
        %513 = vmatpush1.xpose.msra.mxu0 0.0
        %514 = vmatprep.subr.mxu0 0.0
        %515 = vmatpush1.xpose.msra.mxu0 0.0
        %516 = vmatprep.mubr.f32.mxu0 0.0
        %517 = vmatmul.mubr.f32.gmra.mrb[0].mxu0 %v357
        %v518 = vpop.f32.mrb[0].mxu0
        %v519 = vadd.f32 0.0, %v518
        %v520 = vpop.f32.mrb[0].mxu0
        %521 = vmatprep.mubr.f32.mxu0 0.0
        %522 = vmatmul.mubr.f32.gmra.mrb[0].mxu0 %v360
        %v523 = vpop.f32.mrb[0].mxu0
        %v524 = vadd.f32 0.0, %v523
        %v525 = vpop.f32.mrb[0].mxu0
        %526 = vmatprep.mubr.f32.mxu0 0.0
        %527 = vmatmul.mubr.f32.gmra.mrb[0].mxu0 %v363
        %v528 = vpop.f32.mrb[0].mxu0
        %v529 = vadd.f32 0.0, %v528
        %v530 = vpop.f32.mrb[0].mxu0
        %531 = vmatprep.mubr.f32.mxu0 0.0
        %532 = vmatmul.mubr.f32.gmra.mrb[0].mxu0 %v366
        %v533 = vpop.f32.mrb[0].mxu0
        %v534 = vadd.f32 0.0, %v533
        %v535 = vpop.f32.mrb[0].mxu0
        %536 = vmatprep.mubr.f32.mxu0 0.0
        %537 = vmatmul.mubr.f32.gmra.mrb[0].mxu0 %v369
        %v538 = vpop.f32.mrb[0].mxu0
        %v539 = vadd.f32 0.0, %v538
        %v540 = vpop.f32.mrb[0].mxu0
        %541 = vmatprep.mubr.f32.mxu0 0.0
        %542 = vmatmul.mubr.f32.gmra.mrb[0].mxu0 %v372
        %v543 = vpop.f32.mrb[0].mxu0
        %v544 = vadd.f32 0.0, %v543
        %v545 = vpop.f32.mrb[0].mxu0
        %546 = vmatprep.mubr.f32.mxu0 0.0
        %547 = vmatmul.mubr.f32.gmra.mrb[0].mxu0 %v375
        %v548 = vpop.f32.mrb[0].mxu0
        %v549 = vadd.f32 0.0, %v548
        %v550 = vpop.f32.mrb[0].mxu0
        %551 = vmatprep.mubr.f32.mxu0 0.0
        %552 = vmatmul.mubr.f32.gmra.mrb[0].mxu0 %v378
        %v553 = vpop.f32.mrb[0].mxu0
        %v554 = vadd.f32 0.0, %v553
        %v555 = vpop.f32.mrb[0].mxu0
        %556 = vmatprep.mubr.f32.mxu0 0.0
        %557 = vmatmul.mubr.f32.gmra.mrb[0].mxu0 %v381
        %v558 = vpop.f32.mrb[0].mxu0
        %v559 = vadd.f32 0.0, %v558
        %v560 = vpop.f32.mrb[0].mxu0
        %561 = vmatprep.mubr.f32.mxu0 0.0
        %562 = vmatmul.mubr.f32.gmra.mrb[0].mxu0 %v384
        %v563 = vpop.f32.mrb[0].mxu0
        %v564 = vadd.f32 0.0, %v563
        %v565 = vpop.f32.mrb[0].mxu0
        %566 = vmatprep.mubr.f32.mxu0 0.0
        %567 = vmatmul.mubr.f32.gmra.mrb[0].mxu0 %v387
        %v568 = vpop.f32.mrb[0].mxu0
        %v569 = vadd.f32 0.0, %v568
        %v570 = vpop.f32.mrb[0].mxu0
        %571 = vmatprep.mubr.f32.mxu0 0.0
        %572 = vmatmul.mubr.f32.gmra.mrb[0].mxu0 %v390
        %v573 = vpop.f32.mrb[0].mxu0
        %v574 = vadd.f32 0.0, %v573
        %v575 = vpop.f32.mrb[0].mxu0
        %576 = vmatprep.mubr.f32.mxu0 0.0
        %577 = vmatmul.mubr.f32.gmra.mrb[0].mxu0 %v393
        %v578 = vpop.f32.mrb[0].mxu0
        %v579 = vadd.f32 0.0, %v578
        %v580 = vpop.f32.mrb[0].mxu0
        %581 = vmatprep.mubr.f32.mxu0 0.0
        %582 = vmatmul.mubr.f32.gmra.mrb[0].mxu0 %v396
        %v583 = vpop.f32.mrb[0].mxu0
        %v584 = vadd.f32 0.0, %v583
        %v585 = vpop.f32.mrb[0].mxu0
        %586 = vmatprep.mubr.f32.mxu0 0.0
        %587 = vmatmul.mubr.f32.gmra.mrb[0].mxu0 %v399
        %v588 = vpop.f32.mrb[0].mxu0
        %v589 = vadd.f32 0.0, %v588
        %v590 = vpop.f32.mrb[0].mxu0
        %591 = vmatprep.mubr.f32.mxu0 0.0
        %592 = vmatmul.mubr.f32.gmra.mrb[0].mxu0 %v402
        %v593 = vpop.f32.mrb[0].mxu0
        %v594 = vadd.f32 0.0, %v593
        %v595 = vpop.f32.mrb[0].mxu0
        %596 = vdwg.mxu0
        %v597 = vld [vmem:[%s294] sm:$0xff]
        %v598 = vld [vmem:[%s294 + $0x8] sm:$0xff]
        %v599 = vld [vmem:[%s294 + $0x10] sm:$0xff]
        %v600 = vld [vmem:[%s294 + $0x18] sm:$0xff]
        %v601 = vld [vmem:[%s294 + $0x20] sm:$0xff]
        %v602 = vld [vmem:[%s294 + $0x28] sm:$0xff]
        %v603 = vld [vmem:[%s294 + $0x30] sm:$0xff]
        %v604 = vld [vmem:[%s294 + $0x38] sm:$0xff]
        %v605 = vld [vmem:[%s294 + $0x40] sm:$0xff]
        %v606 = vld [vmem:[%s294 + $0x48] sm:$0xff]
        %v607 = vld [vmem:[%s294 + $0x50] sm:$0xff]
        %v608 = vld [vmem:[%s294 + $0x58] sm:$0xff]
        %v609 = vld [vmem:[%s294 + $0x60] sm:$0xff]
        %v610 = vld [vmem:[%s294 + $0x68] sm:$0xff]
        %v611 = vld [vmem:[%s294 + $0x70] sm:$0xff]
        %v612 = vld [vmem:[%s294 + $0x78] sm:$0xff]
        %v613 = vld [vmem:[%s300] sm:$0x1]
        %615 = vset.pattern.permute.xlu0 0
        %616 = vperm.xlu0 %615, %v597
        %v617 = vpop.permute.xlu0 %616
        %620 = vset.pattern.permute.xlu0 0
        %621 = vperm.xlu0 %620, %v598
        %v622 = vpop.permute.xlu0 %621
        %625 = vset.pattern.permute.xlu0 0
        %626 = vperm.xlu0 %625, %v599
        %v627 = vpop.permute.xlu0 %626
        %630 = vset.pattern.permute.xlu0 0
        %631 = vperm.xlu0 %630, %v600
        %v632 = vpop.permute.xlu0 %631
        %635 = vset.pattern.permute.xlu0 0
        %636 = vperm.xlu0 %635, %v601
        %v637 = vpop.permute.xlu0 %636
        %640 = vset.pattern.permute.xlu0 0
        %641 = vperm.xlu0 %640, %v602
        %v642 = vpop.permute.xlu0 %641
        %645 = vset.pattern.permute.xlu0 0
        %646 = vperm.xlu0 %645, %v603
        %v647 = vpop.permute.xlu0 %646
        %650 = vset.pattern.permute.xlu0 0
        %651 = vperm.xlu0 %650, %v604
        %v652 = vpop.permute.xlu0 %651
        %655 = vset.pattern.permute.xlu0 0
        %656 = vperm.xlu0 %655, %v605
        %v657 = vpop.permute.xlu0 %656
        %660 = vset.pattern.permute.xlu0 0
        %661 = vperm.xlu0 %660, %v606
        %v662 = vpop.permute.xlu0 %661
        %665 = vset.pattern.permute.xlu0 0
        %666 = vperm.xlu0 %665, %v607
        %v667 = vpop.permute.xlu0 %666
        %670 = vset.pattern.permute.xlu0 0
        %671 = vperm.xlu0 %670, %v608
        %v672 = vpop.permute.xlu0 %671
        %675 = vset.pattern.permute.xlu0 0
        %676 = vperm.xlu0 %675, %v609
        %v677 = vpop.permute.xlu0 %676
        %680 = vset.pattern.permute.xlu0 0
        %681 = vperm.xlu0 %680, %v610
        %v682 = vpop.permute.xlu0 %681
        %685 = vset.pattern.permute.xlu0 0
        %686 = vperm.xlu0 %685, %v611
        %v687 = vpop.permute.xlu0 %686
        %690 = vset.pattern.permute.xlu0 0
        %691 = vperm.xlu0 %690, %v612
        %v692 = vpop.permute.xlu0 %691
        %v695 = vlaneseq
        %v696 = vshrl.u32 %v695, 7
        %v697 = vsub.s32 0, %v696
        %v698 = vrot.slane %v613, %v697
        %v700 = vadd.f32 %v617, %v698
        %v701 = vadd.f32 %v622, %v698
        %v702 = vadd.f32 %v627, %v698
        %v703 = vadd.f32 %v632, %v698
        %v704 = vadd.f32 %v637, %v698
        %v705 = vadd.f32 %v642, %v698
        %v706 = vadd.f32 %v647, %v698
        %v707 = vadd.f32 %v652, %v698
        %v708 = vadd.f32 %v657, %v698
        %v709 = vadd.f32 %v662, %v698
        %v710 = vadd.f32 %v667, %v698
        %v711 = vadd.f32 %v672, %v698
        %v712 = vadd.f32 %v677, %v698
        %v713 = vadd.f32 %v682, %v698
        %v714 = vadd.f32 %v687, %v698
        %v715 = vadd.f32 %v692, %v698
        %v716 = vadd.f32 %v700, %v519
        %v717 = vadd.f32 %v701, %v524
        %v718 = vadd.f32 %v702, %v529
        %v719 = vadd.f32 %v703, %v534
        %v720 = vadd.f32 %v704, %v539
        %v721 = vadd.f32 %v705, %v544
        %v722 = vadd.f32 %v706, %v549
        %v723 = vadd.f32 %v707, %v554
        %v724 = vadd.f32 %v708, %v559
        %v725 = vadd.f32 %v709, %v564
        %v726 = vadd.f32 %v710, %v569
        %v727 = vadd.f32 %v711, %v574
        %v728 = vadd.f32 %v712, %v579
        %v729 = vadd.f32 %v713, %v584
        %v730 = vadd.f32 %v714, %v589
        %v731 = vadd.f32 %v715, %v594
        %v732 = vmax.f32 %v716, 0.0
        %v733 = vmax.f32 %v717, 0.0
        %v734 = vmax.f32 %v718, 0.0
        %v735 = vmax.f32 %v719, 0.0
        %v736 = vmax.f32 %v720, 0.0
        %v737 = vmax.f32 %v721, 0.0
        %v738 = vmax.f32 %v722, 0.0
        %v739 = vmax.f32 %v723, 0.0
        %v740 = vmax.f32 %v724, 0.0
        %v741 = vmax.f32 %v725, 0.0
        %v742 = vmax.f32 %v726, 0.0
        %v743 = vmax.f32 %v727, 0.0
        %v744 = vmax.f32 %v728, 0.0
        %v745 = vmax.f32 %v729, 0.0
        %v746 = vmax.f32 %v730, 0.0
        %v747 = vmax.f32 %v731, 0.0
        %v748 = vrsqrt.pop %v732
        %v749 = vmul.f32 %v732, %v748
        %vm750 = vcmp.eq.f32.partialorder %v732, inf
        %v751 = vsel %vm750, %v732, %v749
        %vm752 = vcmp.eq.f32.partialorder %v732, 0.0
        %v753 = vand.u32 %v732, 2147483648
        %v754 = vsel %vm752, %v753, %v751
        %v755 = vrsqrt.pop %v733
        %v756 = vmul.f32 %v733, %v755
        %vm757 = vcmp.eq.f32.partialorder %v733, inf
        %v758 = vsel %vm757, %v733, %v756
        %vm759 = vcmp.eq.f32.partialorder %v733, 0.0
        %v760 = vand.u32 %v733, 2147483648
        %v761 = vsel %vm759, %v760, %v758
        %v762 = vrsqrt.pop %v734
        %v763 = vmul.f32 %v734, %v762
        %vm764 = vcmp.eq.f32.partialorder %v734, inf
        %v765 = vsel %vm764, %v734, %v763
        %vm766 = vcmp.eq.f32.partialorder %v734, 0.0
        %v767 = vand.u32 %v734, 2147483648
        %v768 = vsel %vm766, %v767, %v765
        %v769 = vrsqrt.pop %v735
        %v770 = vmul.f32 %v735, %v769
        %vm771 = vcmp.eq.f32.partialorder %v735, inf
        %v772 = vsel %vm771, %v735, %v770
        %vm773 = vcmp.eq.f32.partialorder %v735, 0.0
        %v774 = vand.u32 %v735, 2147483648
        %v775 = vsel %vm773, %v774, %v772
        %v776 = vrsqrt.pop %v736
        %v777 = vmul.f32 %v736, %v776
        %vm778 = vcmp.eq.f32.partialorder %v736, inf
        %v779 = vsel %vm778, %v736, %v777
        %vm780 = vcmp.eq.f32.partialorder %v736, 0.0
        %v781 = vand.u32 %v736, 2147483648
        %v782 = vsel %vm780, %v781, %v779
        %v783 = vrsqrt.pop %v737
        %v784 = vmul.f32 %v737, %v783
        %vm785 = vcmp.eq.f32.partialorder %v737, inf
        %v786 = vsel %vm785, %v737, %v784
        %vm787 = vcmp.eq.f32.partialorder %v737, 0.0
        %v788 = vand.u32 %v737, 2147483648
        %v789 = vsel %vm787, %v788, %v786
        %v790 = vrsqrt.pop %v738
        %v791 = vmul.f32 %v738, %v790
        %vm792 = vcmp.eq.f32.partialorder %v738, inf
        %v793 = vsel %vm792, %v738, %v791
        %vm794 = vcmp.eq.f32.partialorder %v738, 0.0
        %v795 = vand.u32 %v738, 2147483648
        %v796 = vsel %vm794, %v795, %v793
        %v797 = vrsqrt.pop %v739
        %v798 = vmul.f32 %v739, %v797
        %vm799 = vcmp.eq.f32.partialorder %v739, inf
        %v800 = vsel %vm799, %v739, %v798
        %vm801 = vcmp.eq.f32.partialorder %v739, 0.0
        %v802 = vand.u32 %v739, 2147483648
        %v803 = vsel %vm801, %v802, %v800
        %v804 = vrsqrt.pop %v740
        %v805 = vmul.f32 %v740, %v804
        %vm806 = vcmp.eq.f32.partialorder %v740, inf
        %v807 = vsel %vm806, %v740, %v805
        %vm808 = vcmp.eq.f32.partialorder %v740, 0.0
        %v809 = vand.u32 %v740, 2147483648
        %v810 = vsel %vm808, %v809, %v807
        %v811 = vrsqrt.pop %v741
        %v812 = vmul.f32 %v741, %v811
        %vm813 = vcmp.eq.f32.partialorder %v741, inf
        %v814 = vsel %vm813, %v741, %v812
        %vm815 = vcmp.eq.f32.partialorder %v741, 0.0
        %v816 = vand.u32 %v741, 2147483648
        %v817 = vsel %vm815, %v816, %v814
        %v818 = vrsqrt.pop %v742
        %v819 = vmul.f32 %v742, %v818
        %vm820 = vcmp.eq.f32.partialorder %v742, inf
        %v821 = vsel %vm820, %v742, %v819
        %vm822 = vcmp.eq.f32.partialorder %v742, 0.0
        %v823 = vand.u32 %v742, 2147483648
        %v824 = vsel %vm822, %v823, %v821
        %v825 = vrsqrt.pop %v743
        %v826 = vmul.f32 %v743, %v825
        %vm827 = vcmp.eq.f32.partialorder %v743, inf
        %v828 = vsel %vm827, %v743, %v826
        %vm829 = vcmp.eq.f32.partialorder %v743, 0.0
        %v830 = vand.u32 %v743, 2147483648
        %v831 = vsel %vm829, %v830, %v828
        %v832 = vrsqrt.pop %v744
        %v833 = vmul.f32 %v744, %v832
        %vm834 = vcmp.eq.f32.partialorder %v744, inf
        %v835 = vsel %vm834, %v744, %v833
        %vm836 = vcmp.eq.f32.partialorder %v744, 0.0
        %v837 = vand.u32 %v744, 2147483648
        %v838 = vsel %vm836, %v837, %v835
        %v839 = vrsqrt.pop %v745
        %v840 = vmul.f32 %v745, %v839
        %vm841 = vcmp.eq.f32.partialorder %v745, inf
        %v842 = vsel %vm841, %v745, %v840
        %vm843 = vcmp.eq.f32.partialorder %v745, 0.0
        %v844 = vand.u32 %v745, 2147483648
        %v845 = vsel %vm843, %v844, %v842
        %v846 = vrsqrt.pop %v746
        %v847 = vmul.f32 %v746, %v846
        %vm848 = vcmp.eq.f32.partialorder %v746, inf
        %v849 = vsel %vm848, %v746, %v847
        %vm850 = vcmp.eq.f32.partialorder %v746, 0.0
        %v851 = vand.u32 %v746, 2147483648
        %v852 = vsel %vm850, %v851, %v849
        %v853 = vrsqrt.pop %v747
        %v854 = vmul.f32 %v747, %v853
        %vm855 = vcmp.eq.f32.partialorder %v747, inf
        %v856 = vsel %vm855, %v747, %v854
        %vm857 = vcmp.eq.f32.partialorder %v747, 0.0
        %v858 = vand.u32 %v747, 2147483648
        %v859 = vsel %vm857, %v858, %v856
        %v860 = vadd.f32 %v754, 1.0
        %v861 = vadd.f32 %v761, 1.0
        %v862 = vadd.f32 %v768, 1.0
        %v863 = vadd.f32 %v775, 1.0
        %v864 = vadd.f32 %v782, 1.0
        %v865 = vadd.f32 %v789, 1.0
        %v866 = vadd.f32 %v796, 1.0
        %v867 = vadd.f32 %v803, 1.0
        %v868 = vadd.f32 %v810, 1.0
        %v869 = vadd.f32 %v817, 1.0
        %v870 = vadd.f32 %v824, 1.0
        %v871 = vadd.f32 %v831, 1.0
        %v872 = vadd.f32 %v838, 1.0
        %v873 = vadd.f32 %v845, 1.0
        %v874 = vadd.f32 %v852, 1.0
        %v875 = vadd.f32 %v859, 1.0
        %v876 = vrcp.pop %v860
        %v877 = vmul.f32 1.0, %v876
        %v878 = vrcp.pop %v861
        %v879 = vmul.f32 1.0, %v878
        %v880 = vrcp.pop %v862
        %v881 = vmul.f32 1.0, %v880
        %v882 = vrcp.pop %v863
        %v883 = vmul.f32 1.0, %v882
        %v884 = vrcp.pop %v864
        %v885 = vmul.f32 1.0, %v884
        %v886 = vrcp.pop %v865
        %v887 = vmul.f32 1.0, %v886
        %v888 = vrcp.pop %v866
        %v889 = vmul.f32 1.0, %v888
        %v890 = vrcp.pop %v867
        %v891 = vmul.f32 1.0, %v890
        %v892 = vrcp.pop %v868
        %v893 = vmul.f32 1.0, %v892
        %v894 = vrcp.pop %v869
        %v895 = vmul.f32 1.0, %v894
        %v896 = vrcp.pop %v870
        %v897 = vmul.f32 1.0, %v896
        %v898 = vrcp.pop %v871
        %v899 = vmul.f32 1.0, %v898
        %v900 = vrcp.pop %v872
        %v901 = vmul.f32 1.0, %v900
        %v902 = vrcp.pop %v873
        %v903 = vmul.f32 1.0, %v902
        %v904 = vrcp.pop %v874
        %v905 = vmul.f32 1.0, %v904
        %v906 = vrcp.pop %v875
        %v907 = vmul.f32 1.0, %v906
        %v908 = vlaneseq
        %v909 = vshrl.u32 %v908, 7
        %v910 = vadd.s32 %v909, 8
        %v911 = vadd.s32 %v909, 16
        %v912 = vadd.s32 %v909, 24
        %v913 = vadd.s32 %v909, 32
        %v914 = vadd.s32 %v909, 40
        %v915 = vadd.s32 %v909, 48
        %v916 = vadd.s32 %v909, 56
        %v917 = vadd.s32 %v909, 64
        %v918 = vadd.s32 %v909, 72
        %v919 = vadd.s32 %v909, 80
        %v920 = vadd.s32 %v909, 88
        %v921 = vadd.s32 %v909, 96
        %v922 = vadd.s32 %v909, 104
        %v923 = vadd.s32 %v909, 112
        %v924 = vadd.s32 %v909, 120
        %s925 = smul.u32 %s305, 128
        %v926 = vstv %s925
        %v927 = vadd.s32 %v909, %v926
        %v928 = vadd.s32 %v910, %v926
        %v929 = vadd.s32 %v911, %v926
        %v930 = vadd.s32 %v912, %v926
        %v931 = vadd.s32 %v913, %v926
        %v932 = vadd.s32 %v914, %v926
        %v933 = vadd.s32 %v915, %v926
        %v934 = vadd.s32 %v916, %v926
        %v935 = vadd.s32 %v917, %v926
        %v936 = vadd.s32 %v918, %v926
        %v937 = vadd.s32 %v919, %v926
        %v938 = vadd.s32 %v920, %v926
        %v939 = vadd.s32 %v921, %v926
        %v940 = vadd.s32 %v922, %v926
        %v941 = vadd.s32 %v923, %v926
        %v942 = vadd.s32 %v924, %v926
        %v943 = vlaneseq
        %v944 = vand.u32 %v943, 127
        %s945 = smul.u32 %s306, 128
        %v946 = vstv %s945
        %v947 = vadd.s32 %v944, %v946
        %vm948 = vcmp.lt.s32.totalorder %v927, %v947
        %vm949 = vcmp.lt.s32.totalorder %v928, %v947
        %vm950 = vcmp.lt.s32.totalorder %v929, %v947
        %vm951 = vcmp.lt.s32.totalorder %v930, %v947
        %vm952 = vcmp.lt.s32.totalorder %v931, %v947
        %vm953 = vcmp.lt.s32.totalorder %v932, %v947
        %vm954 = vcmp.lt.s32.totalorder %v933, %v947
        %vm955 = vcmp.lt.s32.totalorder %v934, %v947
        %vm956 = vcmp.lt.s32.totalorder %v935, %v947
        %vm957 = vcmp.lt.s32.totalorder %v936, %v947
        %vm958 = vcmp.lt.s32.totalorder %v937, %v947
        %vm959 = vcmp.lt.s32.totalorder %v938, %v947
        %vm960 = vcmp.lt.s32.totalorder %v939, %v947
        %vm961 = vcmp.lt.s32.totalorder %v940, %v947
        %vm962 = vcmp.lt.s32.totalorder %v941, %v947
        %vm963 = vcmp.lt.s32.totalorder %v942, %v947
        %vm964 = vcmp.lt.s32.totalorder %v947, 200
        %vm965 = vmand %vm948, %vm964
        %vm966 = vmand %vm949, %vm964
        %vm967 = vmand %vm950, %vm964
        %vm968 = vmand %vm951, %vm964
        %vm969 = vmand %vm952, %vm964
        %vm970 = vmand %vm953, %vm964
        %vm971 = vmand %vm954, %vm964
        %vm972 = vmand %vm955, %vm964
        %vm973 = vmand %vm956, %vm964
        %vm974 = vmand %vm957, %vm964
        %vm975 = vmand %vm958, %vm964
        %vm976 = vmand %vm959, %vm964
        %vm977 = vmand %vm960, %vm964
        %vm978 = vmand %vm961, %vm964
        %vm979 = vmand %vm962, %vm964
        %vm980 = vmand %vm963, %vm964
        %v981 = vsel %vm965, %v877, 0.0
        %v982 = vsel %vm966, %v879, 0.0
        %v983 = vsel %vm967, %v881, 0.0
        %v984 = vsel %vm968, %v883, 0.0
        %v985 = vsel %vm969, %v885, 0.0
        %v986 = vsel %vm970, %v887, 0.0
        %v987 = vsel %vm971, %v889, 0.0
        %v988 = vsel %vm972, %v891, 0.0
        %v989 = vsel %vm973, %v893, 0.0
        %v990 = vsel %vm974, %v895, 0.0
        %v991 = vsel %vm975, %v897, 0.0
        %v992 = vsel %vm976, %v899, 0.0
        %v993 = vsel %vm977, %v901, 0.0
        %v994 = vsel %vm978, %v903, 0.0
        %v995 = vsel %vm979, %v905, 0.0
        %v996 = vsel %vm980, %v907, 0.0
        %997 = vst [vmem:[%s272] sm:$0xff] %v981
        %998 = vst [vmem:[%s272 + $0x8] sm:$0xff] %v982
        %999 = vst [vmem:[%s272 + $0x10] sm:$0xff] %v983
        %1000 = vst [vmem:[%s272 + $0x18] sm:$0xff] %v984
        %1001 = vst [vmem:[%s272 + $0x20] sm:$0xff] %v985
        %1002 = vst [vmem:[%s272 + $0x28] sm:$0xff] %v986
        %1003 = vst [vmem:[%s272 + $0x30] sm:$0xff] %v987
        %1004 = vst [vmem:[%s272 + $0x38] sm:$0xff] %v988
        %1005 = vst [vmem:[%s272 + $0x40] sm:$0xff] %v989
        %1006 = vst [vmem:[%s272 + $0x48] sm:$0xff] %v990
        %1007 = vst [vmem:[%s272 + $0x50] sm:$0xff] %v991
        %1008 = vst [vmem:[%s272 + $0x58] sm:$0xff] %v992
        %1009 = vst [vmem:[%s272 + $0x60] sm:$0xff] %v993
        %1010 = vst [vmem:[%s272 + $0x68] sm:$0xff] %v994
        %1011 = vst [vmem:[%s272 + $0x70] sm:$0xff] %v995
        %1012 = vst [vmem:[%s272 + $0x78] sm:$0xff] %v996
        %s1013 = sand.u32 %s156, 1
        %s1014 = scalar_lea.sflag [#allocation6], %s1013
        %s1015 = sand.u32 %s156, 1
        %s1016 = smul.addr %s1015, 128
        %s1017 = scalar_lea.vmem [#allocation5], %s1016
        // Predicated region
        $region37: #{tpu_custom_call.1} parent=35 // pred_check
          %p1018 = pneg %p166
        $region38: #{tpu_custom_call.1} parent=35 // pred_check_branch
          %1020 = sbr.rel (%p1018) target = $region40
        $region39: #{tpu_custom_call.1} parent=35 // pred_region
          %s1021 = sld [smem:[#allocation3 + %s30]]
          %s1022 = sld [smem:[#allocation4 + %s30]]
          %s1023 = smul.u32 16, %s1021
          %s1025 = ssub.s32 2048, 2048
          %1026 = vsyncadd %s1014, %s1025
          %s1027 = smul.addr %s1023, 2
          %s1028 = sadd.s32 %s1022, %s1027
          %s1029 = smul.addr %s1028, 128
          %s1030 = scalar_lea.hbm %s6, %s1029
          %s1031 = sshll.u32 %s1017, 4
          %s1032 = int_to_ptr.vmem [resolvable:$true] %s1031
          %1037 = dma.vmem_to_hbm [thread:$0]  %s1032, 2048, %s1030, %s1014, 128, 256, 8
        $region40: #{tpu_custom_call.1} parent=35 // pred_fallthru
          _
      $region36: #{tpu_custom_call.1} parent=5 // pred_fallthru
        _
      %p1038 = scmp.le.s32.totalorder 2, %s25
      // Predicated region
      $region41: #{tpu_custom_call.1} parent=5 // pred_check
        %p1039 = pneg %p1038
      $region42: #{tpu_custom_call.1} parent=5 // pred_check_branch
        %1041 = sbr.rel (%p1039) target = $region44
      $region43: #{tpu_custom_call.1} parent=5 // pred_region
        %s1042 = ssub.s32 %s25, 2
        // Predicated region
        $region45: #{tpu_custom_call.1} parent=43 // pred_check
          %p1043 = pneg %p172
        $region46: #{tpu_custom_call.1} parent=43 // pred_check_branch
          %1045 = sbr.rel (%p1043) target = $region48
        $region47: #{tpu_custom_call.1} parent=43 // pred_region
          %s1046 = sand.u32 %s157, 1
          %s1047 = scalar_lea.sflag [#allocation6], %s1046
          %s1048 = sand.u32 %s157, 1
          %s1049 = smul.addr %s1048, 128
          %s1050 = scalar_lea.vmem [#allocation5], %s1049
          %1051 = dma.done %s1047, 2048
        $region48: #{tpu_custom_call.1} parent=43 // pred_fallthru
          _
      $region44: #{tpu_custom_call.1} parent=5 // pred_fallthru
        _
    $region6: #{tpu_custom_call.1} parent=1 // loop_footer
      %s29 = sadd.s32 1, %s25
    $region7: #{tpu_custom_call.1} parent=1 // loop_footer_branch
      %24 = sbr.rel target = $region3
    $region8: #{tpu_custom_call.1} parent=1 // loop_exit
      _
    %1052 = vsyncpa [#allocation6], 1
    %s1053 = scalar_lea.sflag [#allocation6], 1
    %1054 = vsyncpa %s1053, 1

</llo_original>
